<compile_context>
chip_gen: v6e
topology: v6e:2x2x1
jax: 0.10.0
libtpu: 0.0.40
codegen_flags: <defaults>
</compile_context>

<pallas_src>
import jax
import jax.numpy as jnp
from jax.experimental import pallas as pl
from jax.experimental.pallas import tpu as pltpu

LANE = 128              # lane axis width
SUB = 8                 # sublane tile
MAX_BLOCK_ROWS = 2048   # (2048, 128) f32 block = 1 MiB per input -> fits all gens' VMEM
FUSE_MAX_PRED_ROWS = 2048  # keep fake_pred resident in VMEM if <= 1 MiB (typical patch-GAN logits)
_BIG = 1e30             # pad value for logits: softplus(-1e30) == 0 exactly in f32


def _cdiv(a, b):
    return -(-a // b)


def _round_up(a, b):
    return _cdiv(a, b) * b


def _plan(n_elems, max_block_rows=MAX_BLOCK_ROWS):
    """Padded row count (multiple of SUB and of block_rows) and block_rows."""
    rows = _round_up(_cdiv(n_elems, LANE), SUB)
    block_rows = min(max_block_rows, rows)
    rows_padded = _round_up(rows, block_rows)
    return rows_padded, block_rows


def _pad_2d(x, rows_padded, pad_value):
    """Flatten row-major, pad to rows_padded*LANE elems, reshape (rows, LANE).

    Keeps the input dtype; kernels cast to f32 right after the load.
    """
    flat = x.reshape(-1)
    n = flat.shape[0]
    total = rows_padded * LANE
    if total != n:
        flat = jnp.pad(flat, (0, total - n), constant_values=pad_value)
    return flat.reshape(rows_padded, LANE)


def _softplus_neg(x):
    # BCEWithLogits with target == 1:  loss_i = softplus(-x_i)
    # stable form: max(-x, 0) + log1p(exp(-|x|)); exactly 0 for very large +x.
    return jnp.maximum(-x, 0.0) + jnp.log1p(jnp.exp(-jnp.abs(x)))


# ---------------------------------------------------------------------------
# Fused kernel: streams |fake - real| over the grid with a VMEM (8,128)
# accumulator (sublane-grouped VPU partial sums; scalar collapse only on the
# last step) and computes the BCE sum once, at step 0, over the small
# VMEM-resident fake_pred block.  Padding makes masking unnecessary.
# ---------------------------------------------------------------------------
def _fused_kernel(a_ref, b_ref, p_ref, l1_ref, bce_ref, acc_ref):
    i = pl.program_id(0)

    @pl.when(i == 0)
    def _():
        acc_ref[...] = jnp.zeros_like(acc_ref)
        x = p_ref[...].astype(jnp.float32)
        bce_ref[0, 0] = jnp.sum(_softplus_neg(x))

    a = a_ref[...].astype(jnp.float32)
    b = b_ref[...].astype(jnp.float32)
    d = jnp.abs(a - b)
    # Sublane-grouped partial sum: pure VPU adds each step, no XLU reduce.
    acc_ref[...] += d.reshape(-1, SUB, LANE).sum(axis=0)

    @pl.when(i == pl.num_programs(0) - 1)
    def _():
        l1_ref[0, 0] = jnp.sum(acc_ref[...])


# Standalone streaming reductions (fallback when fake_pred is too large to
# keep resident alongside the L1 stream).
def _abs_diff_sum_kernel(a_ref, b_ref, o_ref, acc_ref):
    i = pl.program_id(0)

    @pl.when(i == 0)
    def _():
        acc_ref[...] = jnp.zeros_like(acc_ref)

    d = jnp.abs(a_ref[...].astype(jnp.float32) - b_ref[...].astype(jnp.float32))
    acc_ref[...] += d.reshape(-1, SUB, LANE).sum(axis=0)

    @pl.when(i == pl.num_programs(0) - 1)
    def _():
        o_ref[0, 0] = jnp.sum(acc_ref[...])


def _softplus_sum_kernel(x_ref, o_ref, acc_ref):
    i = pl.program_id(0)

    @pl.when(i == 0)
    def _():
        acc_ref[...] = jnp.zeros_like(acc_ref)

    sp = _softplus_neg(x_ref[...].astype(jnp.float32))
    acc_ref[...] += sp.reshape(-1, SUB, LANE).sum(axis=0)

    @pl.when(i == pl.num_programs(0) - 1)
    def _():
        o_ref[0, 0] = jnp.sum(acc_ref[...])


def _scalar_smem_spec():
    return pl.BlockSpec((1, 1), lambda i: (0, 0), memory_space=pltpu.SMEM)


def _reduce_sum_call(kernel, arrays, block_rows):
    rows = arrays[0].shape[0]
    grid = rows // block_rows
    out = pl.pallas_call(
        kernel,
        out_shape=jax.ShapeDtypeStruct((1, 1), jnp.float32),
        grid_spec=pltpu.PrefetchScalarGridSpec(
            num_scalar_prefetch=0,
            grid=(grid,),
            in_specs=[
                pl.BlockSpec((block_rows, LANE), lambda i: (i, 0))
                for _ in arrays
            ],
            out_specs=_scalar_smem_spec(),
            scratch_shapes=[pltpu.VMEM((SUB, LANE), jnp.float32)],
        ),
        compiler_params=pltpu.CompilerParams(
            dimension_semantics=("arbitrary",)
        ),
    )(*arrays)
    return out[0, 0]


def generator_loss(fake, real, fake_pred, alpha=100.0):
    """Pallas implementation of GeneratorLoss.forward."""
    assert fake.shape == real.shape, "L1Loss inputs must have equal shapes"

    n_l1 = int(fake.size)
    n_bce = int(fake_pred.size)

    rows_l1, br_l1 = _plan(n_l1)
    a2d = _pad_2d(fake, rows_l1, 0.0)
    b2d = _pad_2d(real, rows_l1, 0.0)
    grid_l1 = rows_l1 // br_l1

    pred_rows = _round_up(_cdiv(n_bce, LANE), SUB)

    if pred_rows <= FUSE_MAX_PRED_ROWS:
        # Single launch: the small BCE term rides along with the L1 stream.
        p2d = _pad_2d(fake_pred, pred_rows, _BIG)
        l1_sum, bce_sum = pl.pallas_call(
            _fused_kernel,
            out_shape=(
                jax.ShapeDtypeStruct((1, 1), jnp.float32),
                jax.ShapeDtypeStruct((1, 1), jnp.float32),
            ),
            grid_spec=pltpu.PrefetchScalarGridSpec(
                num_scalar_prefetch=0,
                grid=(grid_l1,),
                in_specs=[
                    pl.BlockSpec((br_l1, LANE), lambda i: (i, 0)),
                    pl.BlockSpec((br_l1, LANE), lambda i: (i, 0)),
                    pl.BlockSpec((pred_rows, LANE), lambda i: (0, 0)),  # resident
                ],
                out_specs=(_scalar_smem_spec(), _scalar_smem_spec()),
                scratch_shapes=[pltpu.VMEM((SUB, LANE), jnp.float32)],
            ),
            compiler_params=pltpu.CompilerParams(
                dimension_semantics=("arbitrary",)
            ),
        )(a2d, b2d, p2d)
        l1_sum = l1_sum[0, 0]
        bce_sum = bce_sum[0, 0]
    else:
        # fake_pred too large to keep resident: two streaming reductions.
        rows_p, br_p = _plan(n_bce)
        p2d = _pad_2d(fake_pred, rows_p, _BIG)
        l1_sum = _reduce_sum_call(_abs_diff_sum_kernel, (a2d, b2d), br_l1)
        bce_sum = _reduce_sum_call(_softplus_sum_kernel, (p2d,), br_p)

    return bce_sum / jnp.float32(n_bce) + jnp.float32(alpha) * (
        l1_sum / jnp.float32(n_l1)
    )


def _reference(fake, real, fake_pred, alpha=100.0):
    fake = fake.astype(jnp.float32)
    real = real.astype(jnp.float32)
    x = fake_pred.astype(jnp.float32)
    bce = jnp.mean(jnp.maximum(-x, 0.0) + jnp.log1p(jnp.exp(-jnp.abs(x))))
    l1 = jnp.mean(jnp.abs(fake - real))
    return bce + alpha * l1


if __name__ == "__main__":
    key = jax.random.PRNGKey(0)
    k1, k2, k3 = jax.random.split(key, 3)

    # fake/real: generated vs target images (NCHW); fake_pred: patch-discriminator logits.
    fake = jax.random.normal(k1, (2, 4, 16, 16), dtype=jnp.float32)
    real = jax.random.normal(k2, (2, 4, 16, 16), dtype=jnp.float32)
    fake_pred = jax.random.normal(k3, (2, 1, 16, 16), dtype=jnp.float32)

    loss = generator_loss(fake, real, fake_pred, alpha=100.0)
    loss = jax.block_until_ready(loss)

    ref = _reference(fake, real, fake_pred, alpha=100.0)
    assert jnp.allclose(loss, ref, rtol=1e-5, atol=1e-5), (loss, ref)

    print("KERNEL_OK")
</pallas_src>

<mosaic_0001>
module attributes {stable_mosaic.version = 11 : i64} {
  func.func @_fused_kernel(%arg0: i32, %arg1: memref<16x128xf32, #tpu.memory_space<vmem>>, %arg2: memref<16x128xf32, #tpu.memory_space<vmem>>, %arg3: memref<8x128xf32, #tpu.memory_space<vmem>>, %arg4: memref<1x1xf32, #tpu.memory_space<smem>>, %arg5: memref<1x1xf32, #tpu.memory_space<smem>>, %arg6: memref<8x128xf32, #tpu.memory_space<vmem>>) attributes {dimension_semantics = [#tpu.dimension_semantics<arbitrary>], iteration_bounds = array<i64: 1>, scalar_prefetch = 0 : i64, scratch_operands = 1 : i64, tpu.core_type = #tpu.core_type<tc>, window_params = [{transform_indices = @transform_0, window_bounds = array<i64: 16, 128>}, {transform_indices = @transform_1, window_bounds = array<i64: 16, 128>}, {pipeline_mode = #tpu.pipeline_mode<synchronous>, transform_indices = @transform_2, window_bounds = array<i64: 8, 128>}, {transform_indices = @transform_3, window_bounds = array<i64: 1, 1>}, {transform_indices = @transform_4, window_bounds = array<i64: 1, 1>}]} {
    %c0_i32 = arith.constant 0 : i32
    %0 = arith.cmpi eq, %arg0, %c0_i32 : i32
    %1 = arith.extui %0 : i1 to i32
    %c0_i32_0 = arith.constant 0 : i32
    %2 = arith.cmpi ne, %1, %c0_i32_0 : i32
    scf.if %2 {
      %cst_10 = arith.constant 0.000000e+00 : f32
      %15 = vector.broadcast %cst_10 : f32 to vector<8x128xf32>
      %c0_11 = arith.constant 0 : index
      %c0_12 = arith.constant 0 : index
      %16 = vector.load %arg6[%c0_11, %c0_12] : memref<8x128xf32, #tpu.memory_space<vmem>>, vector<8x128xf32>
      tpu.vector_store %arg6[%c0_11, %c0_12], %15 {strides = array<i32>} : memref<8x128xf32, #tpu.memory_space<vmem>>, vector<8x128xf32>,
      %c0_13 = arith.constant 0 : index
      %c0_14 = arith.constant 0 : index
      %17 = vector.load %arg3[%c0_13, %c0_14] : memref<8x128xf32, #tpu.memory_space<vmem>>, vector<8x128xf32>
      %cst_15 = arith.constant 0.000000e+00 : f32
      %18 = vector.broadcast %cst_15 : f32 to vector<8x128xf32>
      %19 = arith.subf %18, %17 : vector<8x128xf32>
      %cst_16 = arith.constant 0.000000e+00 : f32
      %20 = vector.broadcast %cst_16 : f32 to vector<8x128xf32>
      %21 = arith.maximumf %19, %20 : vector<8x128xf32>
      %22 = math.absf %17 : vector<8x128xf32>
      %cst_17 = arith.constant 0.000000e+00 : f32
      %23 = vector.broadcast %cst_17 : f32 to vector<8x128xf32>
      %24 = arith.subf %23, %22 : vector<8x128xf32>
      %25 = math.exp %24 : vector<8x128xf32>
      %26 = math.log1p %25 : vector<8x128xf32>
      %27 = arith.addf %21, %26 : vector<8x128xf32>
      %28 = vector.shape_cast %27 : vector<8x128xf32> to vector<1x8x128xf32>
      %cst_18 = arith.constant dense<0.000000e+00> : vector<1xf32>
      %29 = vector.multi_reduction <add>, %28, %cst_18 [1, 2] : vector<1x8x128xf32> to vector<1xf32>
      %30 = vector.shape_cast %29 : vector<1xf32> to vector<1x1x1xf32>
      %31 = vector.extract %30[0, 0, 0] : f32 from vector<1x1x1xf32>
      %c0_19 = arith.constant 0 : index
      %c0_20 = arith.constant 0 : index
      %32 = memref.load %arg5[%c0_19, %c0_20] : memref<1x1xf32, #tpu.memory_space<smem>>
      memref.store %31, %arg5[%c0_19, %c0_20] : memref<1x1xf32, #tpu.memory_space<smem>>
    } else {
    }
    %c0 = arith.constant 0 : index
    %c0_1 = arith.constant 0 : index
    %3 = vector.load %arg1[%c0, %c0_1] : memref<16x128xf32, #tpu.memory_space<vmem>>, vector<16x128xf32>
    %c0_2 = arith.constant 0 : index
    %c0_3 = arith.constant 0 : index
    %4 = vector.load %arg2[%c0_2, %c0_3] : memref<16x128xf32, #tpu.memory_space<vmem>>, vector<16x128xf32>
    %5 = arith.subf %3, %4 : vector<16x128xf32>
    %6 = math.absf %5 : vector<16x128xf32>
    %c0_4 = arith.constant 0 : index
    %c0_5 = arith.constant 0 : index
    %7 = vector.load %arg6[%c0_4, %c0_5] : memref<8x128xf32, #tpu.memory_space<vmem>>, vector<8x128xf32>
    %8 = vector.shape_cast %6 : vector<16x128xf32> to vector<2x8x128xf32>
    %cst = arith.constant dense<0.000000e+00> : vector<8x128xf32>
    %9 = vector.multi_reduction <add>, %8, %cst [0] : vector<2x8x128xf32> to vector<8x128xf32>
    %10 = arith.addf %7, %9 : vector<8x128xf32>
    %c0_6 = arith.constant 0 : index
    %c0_7 = arith.constant 0 : index
    %11 = vector.load %arg6[%c0_6, %c0_7] : memref<8x128xf32, #tpu.memory_space<vmem>>, vector<8x128xf32>
    tpu.vector_store %arg6[%c0_6, %c0_7], %10 {strides = array<i32>} : memref<8x128xf32, #tpu.memory_space<vmem>>, vector<8x128xf32>,
    %c0_i32_8 = arith.constant 0 : i32
    %12 = arith.cmpi eq, %arg0, %c0_i32_8 : i32
    %13 = arith.extui %12 : i1 to i32
    %c0_i32_9 = arith.constant 0 : i32
    %14 = arith.cmpi ne, %13, %c0_i32_9 : i32
    scf.if %14 {
      %c0_10 = arith.constant 0 : index
      %c0_11 = arith.constant 0 : index
      %15 = vector.load %arg6[%c0_10, %c0_11] : memref<8x128xf32, #tpu.memory_space<vmem>>, vector<8x128xf32>
      %16 = vector.shape_cast %15 : vector<8x128xf32> to vector<1x8x128xf32>
      %cst_12 = arith.constant dense<0.000000e+00> : vector<1xf32>
      %17 = vector.multi_reduction <add>, %16, %cst_12 [1, 2] : vector<1x8x128xf32> to vector<1xf32>
      %18 = vector.shape_cast %17 : vector<1xf32> to vector<1x1x1xf32>
      %19 = vector.extract %18[0, 0, 0] : f32 from vector<1x1x1xf32>
      %c0_13 = arith.constant 0 : index
      %c0_14 = arith.constant 0 : index
      %20 = memref.load %arg4[%c0_13, %c0_14] : memref<1x1xf32, #tpu.memory_space<smem>>
      memref.store %19, %arg4[%c0_13, %c0_14] : memref<1x1xf32, #tpu.memory_space<smem>>
    } else {
    }
    return
  }
  func.func @transform_0(%arg0: i32) -> (i32, i32) {
    %c0_i32 = arith.constant 0 : i32
    %c0_i32_0 = arith.constant 0 : i32
    return %arg0, %c0_i32 : i32, i32
  }
  func.func @transform_1(%arg0: i32) -> (i32, i32) {
    %c0_i32 = arith.constant 0 : i32
    %c0_i32_0 = arith.constant 0 : i32
    return %arg0, %c0_i32 : i32, i32
  }
  func.func @transform_2(%arg0: i32) -> (i32, i32) {
    %c0_i32 = arith.constant 0 : i32
    %c0_i32_0 = arith.constant 0 : i32
    %c0_i32_1 = arith.constant 0 : i32
    return %c0_i32, %c0_i32_0 : i32, i32
  }
  func.func @transform_3(%arg0: i32) -> (i32, i32) {
    %c0_i32 = arith.constant 0 : i32
    %c0_i32_0 = arith.constant 0 : i32
    %c0_i32_1 = arith.constant 0 : i32
    return %c0_i32, %c0_i32_0 : i32, i32
  }
  func.func @transform_4(%arg0: i32) -> (i32, i32) {
    %c0_i32 = arith.constant 0 : i32
    %c0_i32_0 = arith.constant 0 : i32
    %c0_i32_1 = arith.constant 0 : i32
    return %c0_i32, %c0_i32_0 : i32, i32
  }
}

</mosaic_0001>

<llo_original>
// kernel: tpu_custom_call.1
$region0: #{tpu_custom_call.1}
  #allocation0 [shape = 'u32[]', space=smem, size = 0x4, offset = 0x4, fixed_abs, tag = 'smem constant byte address 0x4 - core index']
  #allocation1 [shape = 'u32[144,128]{1,0:T(1,128)}', space=vmem, size = 0x12000, scoped, tag = 'internal scratch']
  #allocation2 [shape = 'f32[8,128]{1,0:T(8,128)}', space=vmem, size = 0x1000, scoped, tag = 'scratch operand']
  %s0 = inlined_call_operand.hbm [shape: f32[16,128], index: 0, kind: input, shape index: {}]
  %s1 = inlined_call_operand.hbm [shape: f32[16,128], index: 1, kind: input, shape index: {}]
  %s2 = inlined_call_operand.hbm [shape: f32[8,128], index: 2, kind: input, shape index: {}]
  %s3 = inlined_call_operand.hbm [shape: f32[1,1], index: 3, kind: output, shape index: {0}]
  %s4 = inlined_call_operand.hbm [shape: f32[1,1], index: 4, kind: output, shape index: {1}]
  %5 = xla_tuple %s3, %s4
  %s6 = sld [smem:[#allocation0]]
  $region50: #{tpu_custom_call.1} parent=0
    _
  %s8 = ssub.s32 1, %s6
  %s9 = scalar_select 0, %s8, %s6
  $region1: #{tpu_custom_call.1} parent=0
    #allocation3 [shape = 'u8[8192]{0}', space=vmem, size = 0x2000, scoped, tag = 'input window, operand 0, single buffered']
    #allocation4 [shape = 's32[1]{0}', space=sflag, size = 0x4, scoped, tag = 'scoped memory for tpu_custom_call.1']
    #allocation5 [shape = 's32[1]{0}', space=sflag, size = 0x4, scoped, tag = 'scoped memory for tpu_custom_call.1']
    #allocation6 [shape = 'u8[8192]{0}', space=vmem, size = 0x2000, scoped, tag = 'input window, operand 1, single buffered']
    #allocation7 [shape = 's32[1]{0}', space=sflag, size = 0x4, scoped, tag = 'scoped memory for tpu_custom_call.1']
    #allocation8 [shape = 'u8[4096]{0}', space=vmem, size = 0x1000, scoped, tag = 'input window, operand 2, single buffered']
    #allocation9 [shape = 'u8[512]{0}', space=smem, size = 0x200, scoped, tag = 'output window, operand 0, single buffered']
    #allocation10 [shape = 'u8[512]{0}', space=smem, size = 0x200, scoped, tag = 'output window, operand 1, single buffered']
    #allocation11 [shape = 's32[1]{0}', space=sflag, size = 0x4, scoped, tag = 'scoped memory for tpu_custom_call.1']
    %10 = vsyncpa [#allocation4], 0
    %11 = vsyncpa [#allocation7], 0
    %12 = vsyncpa [#allocation5], 0
    %13 = vsyncpa [#allocation11], 0
    // Predicated region
    $region2: #{tpu_custom_call.1} parent=1 // pred_check
      _
    $region3: #{tpu_custom_call.1} parent=1 // pred_check_branch
      %15 = sbr.rel (0) target = $region5
    $region4: #{tpu_custom_call.1} parent=1 // pred_region
      %s17 = ssub.s32 256, 256
      %18 = vsyncadd [#allocation4], %s17
      %s19 = sshll.u32 [#allocation3], 4
      %s20 = int_to_ptr.vmem [resolvable:$true] %s19
      %25 = dma.hbm_to_vmem [thread:$0]  %s0, 256, %s20, [#allocation4], 128, 128, 8
    $region5: #{tpu_custom_call.1} parent=1 // pred_fallthru
      _
    // Predicated region
    $region6: #{tpu_custom_call.1} parent=1 // pred_check
      _
    $region7: #{tpu_custom_call.1} parent=1 // pred_check_branch
      %27 = sbr.rel (0) target = $region9
    $region8: #{tpu_custom_call.1} parent=1 // pred_region
      %s29 = ssub.s32 256, 256
      %30 = vsyncadd [#allocation7], %s29
      %s31 = sshll.u32 [#allocation6], 4
      %s32 = int_to_ptr.vmem [resolvable:$true] %s31
      %37 = dma.hbm_to_vmem [thread:$0]  %s1, 256, %s32, [#allocation7], 128, 128, 8
    $region9: #{tpu_custom_call.1} parent=1 // pred_fallthru
      _
    // Predicated region
    $region10: #{tpu_custom_call.1} parent=1 // pred_check
      _
    $region11: #{tpu_custom_call.1} parent=1 // pred_check_branch
      %39 = sbr.rel (0) target = $region13
    $region12: #{tpu_custom_call.1} parent=1 // pred_region
      %s41 = ssub.s32 128, 128
      %42 = vsyncadd [#allocation7], %s41
      %s44 = sshll.u32 [#allocation8], 4
      %s45 = int_to_ptr.vmem [resolvable:$true] %s44
      %47 = dma.hbm_to_vmem [thread:$0]  %s2, 128, %s45, [#allocation7]
    $region13: #{tpu_custom_call.1} parent=1 // pred_fallthru
      _
    // Predicated region
    $region14: #{tpu_custom_call.1} parent=1 // pred_check
      _
    $region15: #{tpu_custom_call.1} parent=1 // pred_check_branch
      %49 = sbr.rel (0) target = $region17
    $region16: #{tpu_custom_call.1} parent=1 // pred_region
      %50 = dma.done [#allocation4], 256
    $region17: #{tpu_custom_call.1} parent=1 // pred_fallthru
      _
    // Predicated region
    $region18: #{tpu_custom_call.1} parent=1 // pred_check
      _
    $region19: #{tpu_custom_call.1} parent=1 // pred_check_branch
      %52 = sbr.rel (0) target = $region21
    $region20: #{tpu_custom_call.1} parent=1 // pred_region
      %53 = dma.done [#allocation7], 256
    $region21: #{tpu_custom_call.1} parent=1 // pred_fallthru
      _
    // Predicated region
    $region22: #{tpu_custom_call.1} parent=1 // pred_check
      _
    $region23: #{tpu_custom_call.1} parent=1 // pred_check_branch
      %55 = sbr.rel (0) target = $region25
    $region24: #{tpu_custom_call.1} parent=1 // pred_region
      %56 = dma.done [#allocation7], 128
    $region25: #{tpu_custom_call.1} parent=1 // pred_fallthru
      _
    %p57 = scmp.eq.s32.totalorder 0, 0
    // Predicated region
    $region26: #{tpu_custom_call.1} parent=1 // pred_check
      %p58 = pneg %p57
    $region27: #{tpu_custom_call.1} parent=1 // pred_check_branch
      %60 = sbr.rel (%p58) target = $region29
    $region28: #{tpu_custom_call.1} parent=1 // pred_region
      %61 = vst [vmem:[#allocation2] sm:$0xff] 0.0
      %v62 = vld [vmem:[#allocation8] sm:$0xff]
      %v63 = vsub.f32 0.0, %v62
      %v64 = vmax.f32 %v63, 0.0
      %v65 = vand.u32 2147483647, %v62
      %v66 = vsub.f32 0.0, %v65
      %v67 = vmul.f32 %v66, 1.442695
      %v68 = vpow.pop %v67
      %v69 = vadd.f32 %v68, 1.0
      %v70 = vlog2.pop %v69
      %v71 = vmul.f32 %v70, 0.6931472
      %v72 = vmul.f32 -0.5, %v68
      %v73 = vadd.f32 %v72, 1.0
      %v74 = vmul.f32 %v73, %v68
      %v75 = vand.u32 2147483647, %v68
      %vm76 = vcmp.lt.f32.partialorder %v75, 0.0004427343
      %v77 = vsel %vm76, %v74, %v71
      %v78 = vadd.f32 %v64, %v77
      %79 = vadd.xlane.f32.xlu0 %v78
      %v80 = vpop.xlane.xlu0 %79
      %v81 = vrot.slane %v80, 4
      %v82 = vadd.f32 %v80, %v81
      %v83 = vrot.slane %v82, 2
      %v84 = vadd.f32 %v82, %v83
      %v85 = vrot.slane %v84, 1
      %v86 = vadd.f32 %v84, %v85
      %s87 = vtos %v86
      %s88 = scalar_lea.smem [#allocation10], 0
      %89 = sst [smem:[%s88]] %s87
    $region29: #{tpu_custom_call.1} parent=1 // pred_fallthru
      _
    %v90 = vld [vmem:[#allocation3] sm:$0xff]
    %v91 = vld [vmem:[#allocation3 + $0x8] sm:$0xff]
    %v92 = vld [vmem:[#allocation6] sm:$0xff]
    %v93 = vld [vmem:[#allocation6 + $0x8] sm:$0xff]
    %v94 = vsub.f32 %v90, %v92
    %v95 = vsub.f32 %v91, %v93
    %v96 = vand.u32 2147483647, %v94
    %v97 = vand.u32 2147483647, %v95
    %v98 = vld [vmem:[#allocation2] sm:$0xff]
    %v99 = vadd.f32 %v96, %v97
    %v100 = vadd.f32 %v98, %v99
    %101 = vst [vmem:[#allocation2] sm:$0xff] %v100
    // Predicated region
    $region30: #{tpu_custom_call.1} parent=1 // pred_check
      %p102 = pneg %p57
    $region31: #{tpu_custom_call.1} parent=1 // pred_check_branch
      %104 = sbr.rel (%p102) target = $region33
    $region32: #{tpu_custom_call.1} parent=1 // pred_region
      %v105 = vld [vmem:[#allocation2] sm:$0xff]
      %106 = vadd.xlane.f32.xlu0 %v105
      %v107 = vpop.xlane.xlu0 %106
      %v108 = vrot.slane %v107, 4
      %v109 = vadd.f32 %v107, %v108
      %v110 = vrot.slane %v109, 2
      %v111 = vadd.f32 %v109, %v110
      %v112 = vrot.slane %v111, 1
      %v113 = vadd.f32 %v111, %v112
      %s114 = vtos %v113
      %s115 = scalar_lea.smem [#allocation9], 0
      %116 = sst [smem:[%s115]] %s114
    $region33: #{tpu_custom_call.1} parent=1 // pred_fallthru
      _
    // Predicated region
    $region34: #{tpu_custom_call.1} parent=1 // pred_check
      _
    $region35: #{tpu_custom_call.1} parent=1 // pred_check_branch
      %118 = sbr.rel (0) target = $region37
    $region36: #{tpu_custom_call.1} parent=1 // pred_region
      %s120 = ssub.s32 16, 16
      %121 = vsyncadd [#allocation5], %s120
      %124 = dma.smem_to_hbm [#allocation9], 16, %s3, [#allocation5]
    $region37: #{tpu_custom_call.1} parent=1 // pred_fallthru
      _
    // Predicated region
    $region38: #{tpu_custom_call.1} parent=1 // pred_check
      _
    $region39: #{tpu_custom_call.1} parent=1 // pred_check_branch
      %126 = sbr.rel (0) target = $region41
    $region40: #{tpu_custom_call.1} parent=1 // pred_region
      %s128 = ssub.s32 16, 16
      %129 = vsyncadd [#allocation11], %s128
      %132 = dma.smem_to_hbm [#allocation10], 16, %s4, [#allocation11]
    $region41: #{tpu_custom_call.1} parent=1 // pred_fallthru
      _
    // Predicated region
    $region42: #{tpu_custom_call.1} parent=1 // pred_check
      _
    $region43: #{tpu_custom_call.1} parent=1 // pred_check_branch
      %134 = sbr.rel (0) target = $region45
    $region44: #{tpu_custom_call.1} parent=1 // pred_region
      %135 = dma.done [#allocation5], 16
    $region45: #{tpu_custom_call.1} parent=1 // pred_fallthru
      _
    // Predicated region
    $region46: #{tpu_custom_call.1} parent=1 // pred_check
      _
    $region47: #{tpu_custom_call.1} parent=1 // pred_check_branch
      %137 = sbr.rel (0) target = $region49
    $region48: #{tpu_custom_call.1} parent=1 // pred_region
      %138 = dma.done [#allocation11], 16
    $region49: #{tpu_custom_call.1} parent=1 // pred_fallthru
      _
    %139 = sfence
    %140 = vsyncpa [#allocation4], 1
    %141 = vsyncpa [#allocation7], 1
    %142 = vsyncpa [#allocation5], 1
    %143 = vsyncpa [#allocation11], 1

</llo_original>
